<compile_context>
chip_gen: v5e
topology: v5e:2x2
jax: 0.10.0
libtpu: 0.0.40
codegen_flags: <defaults>
</compile_context>

<pallas_src>
import functools

import jax
import jax.numpy as jnp
from jax.experimental import pallas as pl
from jax.experimental.pallas import tpu as pltpu

EPS = 1e-12  # F.normalize default eps

_LANE = 128
_TARGET_BLOCK_BYTES = 1 << 20   # ~1 MiB of input bytes per grid step
_MAX_TLW = 8192                 # cap on lanes per block


def _round_up(x, m):
    return ((x + m - 1) // m) * m


def _round_down(x, m):
    return (x // m) * m


def _l2norm_kernel(x_ref, w_ref, o_ref, *, hw, tlw, ragged):
    # x_ref: (TN, C, TLW)   w_ref: (1, C, 1) float32   o_ref: (TN, C, TLW)
    xf = x_ref[...].astype(jnp.float32)
    if ragged:
        # Boundary lane block: zero lanes past HW so the channel reduction is
        # clean (Pallas discards out-of-range lanes on writeback anyway).
        lane = jax.lax.broadcasted_iota(jnp.int32, xf.shape, xf.ndim - 1)
        valid = pl.program_id(1) * tlw + lane < hw
        xf = jnp.where(valid, xf, 0.0)
    ssq = jnp.sum(xf * xf, axis=1, keepdims=True)              # (TN, 1, TLW)
    # 1 / max(sqrt(ssq), EPS)  ==  rsqrt(max(ssq, EPS^2))   (EUP, not VALU div)
    inv = jax.lax.rsqrt(jnp.maximum(ssq, EPS * EPS))
    # Re-read x (VMEM load) instead of keeping the f32 copy live across ssq.
    o_ref[...] = (x_ref[...].astype(jnp.float32) * inv * w_ref[...]).astype(o_ref.dtype)


def _choose_tiling(N, C, HW, itemsize):
    """Pick (TN, TLW): batch rows and lane extent per block."""
    hw_ceil = _round_up(HW, _LANE)
    row_bytes = max(1, C * itemsize)                     # bytes per lane column
    want_lanes = max(_LANE, _round_down(_TARGET_BLOCK_BYTES // row_bytes, _LANE))
    tlw = min(hw_ceil, want_lanes, _MAX_TLW)

    tn = 1
    if pl.cdiv(HW, tlw) == 1:
        # Whole spatial extent fits in one lane block: batch rows to reach
        # the target block size.
        blk_bytes = max(1, C * tlw * itemsize)
        tn = int(min(N, max(1, _TARGET_BLOCK_BYTES // blk_bytes)))

    # Guarantee >= 2 grid programs so both v7x TensorCores get work.
    if pl.cdiv(N, tn) * pl.cdiv(HW, tlw) < 2:
        if tlw >= 2 * _LANE:
            tlw = max(_LANE, _round_up(tlw // 2, _LANE))
        elif tn >= 2:
            tn = pl.cdiv(tn, 2)
    return tn, tlw


def l2norm(x_nchw, weight):
    """x_nchw: (N, C, H, W); weight: (C,). Returns weight * F.normalize(x, dim=1)."""
    N, C, H, W = x_nchw.shape
    HW = H * W
    itemsize = jnp.dtype(x_nchw.dtype).itemsize

    TN, TLW = _choose_tiling(N, C, HW, itemsize)
    ragged = (HW % TLW) != 0
    grid = (pl.cdiv(N, TN), pl.cdiv(HW, TLW))

    # Free (contiguous) reshapes; no pad / slice HBM round-trips.
    x3 = x_nchw.reshape(N, C, HW)
    w3 = weight.reshape(1, C, 1).astype(jnp.float32)     # keep full precision

    # VMEM actually needed: double-buffered in+out blocks + f32 temporaries.
    blk_elems = TN * C * TLW
    live_bytes = 2 * 2 * blk_elems * itemsize + 3 * blk_elems * 4 + (1 << 20)
    vmem_limit = int(min(48 << 20, max(16 << 20, live_bytes)))

    kernel = functools.partial(_l2norm_kernel, hw=HW, tlw=TLW, ragged=ragged)

    out = pl.pallas_call(
        kernel,
        out_shape=jax.ShapeDtypeStruct((N, C, HW), x_nchw.dtype),
        grid_spec=pltpu.PrefetchScalarGridSpec(
            num_scalar_prefetch=0,
            grid=grid,
            in_specs=[
                pl.BlockSpec((TN, C, TLW), lambda n, l: (n, 0, l)),
                pl.BlockSpec((1, C, 1), lambda n, l: (0, 0, 0)),
            ],
            out_specs=pl.BlockSpec((TN, C, TLW), lambda n, l: (n, 0, l)),
        ),
        compiler_params=pltpu.CompilerParams(
            dimension_semantics=("parallel", "parallel"),
            vmem_limit_bytes=vmem_limit,
        ),
        cost_estimate=pl.CostEstimate(
            flops=4 * N * C * HW,
            transcendentals=N * HW,
            bytes_accessed=2 * N * C * HW * itemsize + C * 4,
        ),
    )(x3, w3)

    return out.reshape(N, C, H, W)


def l2norm_ref(x_nchw, weight):
    # Pure-JAX reference: F.normalize(x, dim=1) * weight[None,:,None,None]
    norm = jnp.sqrt(jnp.sum(x_nchw * x_nchw, axis=1, keepdims=True))
    return weight[None, :, None, None] * (x_nchw / jnp.maximum(norm, EPS))


if __name__ == "__main__":
    key = jax.random.PRNGKey(0)
    scale = 20.0  # nn.init.constant(weight, scale)

    # Main small example (HW a multiple of 128 -> dense, unmasked stores).
    N, C, H, W = 2, 4, 16, 16
    x = jax.random.normal(key, (N, C, H, W), dtype=jnp.float32)
    weight = jnp.full((C,), scale, dtype=jnp.float32)
    y = l2norm(x, weight)
    jax.block_until_ready(y)
    assert jnp.allclose(y, l2norm_ref(x, weight), atol=1e-5, rtol=1e-5), "mismatch (dense)"

    # Ragged spatial extent (HW=100, not a multiple of 128) exercises the
    # in-kernel boundary lane mask + partial-writeback path (no wrapper pad).
    xr = jax.random.normal(jax.random.PRNGKey(1), (2, 4, 10, 10), dtype=jnp.float32)
    yr = l2norm(xr, weight)
    jax.block_until_ready(yr)
    assert jnp.allclose(yr, l2norm_ref(xr, weight), atol=1e-5, rtol=1e-5), "mismatch (ragged)"

    print("KERNEL_OK")
</pallas_src>

<mosaic_0001>
module attributes {stable_mosaic.version = 11 : i64} {
  func.func @_l2norm_kernel(%arg0: i32, %arg1: i32, %arg2: memref<2x4x128xf32, #tpu.memory_space<vmem>>, %arg3: memref<1x4x1xf32, #tpu.memory_space<vmem>>, %arg4: memref<2x4x128xf32, #tpu.memory_space<vmem>>) attributes {dimension_semantics = [#tpu.dimension_semantics<parallel>, #tpu.dimension_semantics<parallel>], iteration_bounds = array<i64: 1, 2>, scalar_prefetch = 0 : i64, scratch_operands = 0 : i64, tpu.core_type = #tpu.core_type<tc>, window_params = [{transform_indices = @transform_0, window_bounds = array<i64: 2, 4, 128>}, {pipeline_mode = #tpu.pipeline_mode<synchronous>, transform_indices = @transform_1, window_bounds = array<i64: 1, 4, 1>}, {transform_indices = @transform_2, window_bounds = array<i64: 2, 4, 128>}]} {
    %c0 = arith.constant 0 : index
    %c0_0 = arith.constant 0 : index
    %c0_1 = arith.constant 0 : index
    %0 = vector.load %arg2[%c0, %c0_0, %c0_1] : memref<2x4x128xf32, #tpu.memory_space<vmem>>, vector<2x4x128xf32>
    %1 = arith.mulf %0, %0 : vector<2x4x128xf32>
    %cst = arith.constant dense<0.000000e+00> : vector<2x128xf32>
    %2 = vector.multi_reduction <add>, %1, %cst [1] : vector<2x4x128xf32> to vector<2x128xf32>
    %3 = vector.shape_cast %2 : vector<2x128xf32> to vector<2x1x128xf32>
    %cst_2 = arith.constant 1.000000e-24 : f32
    %4 = vector.broadcast %cst_2 : f32 to vector<2x1x128xf32>
    %5 = arith.maximumf %3, %4 : vector<2x1x128xf32>
    %6 = math.rsqrt %5 : vector<2x1x128xf32>
    %c0_3 = arith.constant 0 : index
    %c0_4 = arith.constant 0 : index
    %c0_5 = arith.constant 0 : index
    %7 = vector.load %arg2[%c0_3, %c0_4, %c0_5] : memref<2x4x128xf32, #tpu.memory_space<vmem>>, vector<2x4x128xf32>
    %8 = vector.broadcast %6 : vector<2x1x128xf32> to vector<2x4x128xf32>
    %9 = arith.mulf %7, %8 : vector<2x4x128xf32>
    %c0_6 = arith.constant 0 : index
    %c0_7 = arith.constant 0 : index
    %c0_8 = arith.constant 0 : index
    %10 = vector.load %arg3[%c0_6, %c0_7, %c0_8] : memref<1x4x1xf32, #tpu.memory_space<vmem>>, vector<1x4x1xf32>
    %11 = vector.broadcast %10 : vector<1x4x1xf32> to vector<2x4x128xf32>
    %12 = arith.mulf %9, %11 : vector<2x4x128xf32>
    %c0_9 = arith.constant 0 : index
    %c0_10 = arith.constant 0 : index
    %c0_11 = arith.constant 0 : index
    %13 = vector.load %arg4[%c0_9, %c0_10, %c0_11] : memref<2x4x128xf32, #tpu.memory_space<vmem>>, vector<2x4x128xf32>
    tpu.vector_store %arg4[%c0_9, %c0_10, %c0_11], %12 {strides = array<i32>} : memref<2x4x128xf32, #tpu.memory_space<vmem>>, vector<2x4x128xf32>,
    return
  }
  func.func @transform_0(%arg0: i32, %arg1: i32) -> (i32, i32, i32) {
    %c0_i32 = arith.constant 0 : i32
    %c0_i32_0 = arith.constant 0 : i32
    return %arg0, %c0_i32, %arg1 : i32, i32, i32
  }
  func.func @transform_1(%arg0: i32, %arg1: i32) -> (i32, i32, i32) {
    %c0_i32 = arith.constant 0 : i32
    %c0_i32_0 = arith.constant 0 : i32
    %c0_i32_1 = arith.constant 0 : i32
    %c0_i32_2 = arith.constant 0 : i32
    return %c0_i32, %c0_i32_0, %c0_i32_1 : i32, i32, i32
  }
  func.func @transform_2(%arg0: i32, %arg1: i32) -> (i32, i32, i32) {
    %c0_i32 = arith.constant 0 : i32
    %c0_i32_0 = arith.constant 0 : i32
    return %arg0, %c0_i32, %arg1 : i32, i32, i32
  }
}

</mosaic_0001>

<llo_original>
// kernel: tpu_custom_call.1
$region0: #{tpu_custom_call.1}
  #allocation0 [shape = 'u32[]', space=smem, size = 0x4, offset = 0x4, fixed_abs, tag = 'smem constant byte address 0x4 - core index']
  #allocation1 [shape = 'u32[72,128]{1,0:T(1,128)}', space=vmem, size = 0x9000, scoped, tag = 'internal scratch']
  %s0 = inlined_call_operand.hbm [shape: f32[2,4,256], index: 0, kind: input, shape index: {}]
  %s1 = inlined_call_operand.vmem [shape: f32[1,4,1], index: 1, kind: input, shape index: {}]
  %s2 = inlined_call_operand.hbm [shape: f32[2,4,256], index: 2, kind: output, shape index: {}]
  %s3 = sld [smem:[#allocation0]]
  $region45: #{tpu_custom_call.1} parent=0
    _
  %s5 = ssub.s32 1, %s3
  %s6 = scalar_select 0, %s5, %s3
  $region1: #{tpu_custom_call.1} parent=0
    #allocation2 [shape = 'u8[8192]{0}', space=vmem, size = 0x2000, scoped, tag = 'input window, operand 0']
    #allocation3 [shape = 's32[2]{0}', space=sflag, size = 0x8, scoped, tag = 'scoped memory for tpu_custom_call.1']
    #allocation4 [shape = 's32[2]{0}', space=sflag, size = 0x8, scoped, tag = 'scoped memory for tpu_custom_call.1']
    #allocation5 [shape = 'u8[8192]{0}', space=vmem, size = 0x2000, scoped, tag = 'output window, operand 0']
    %7 = vsyncpa [#allocation3], 0
    %s8 = scalar_lea.sflag [#allocation3], 1
    %9 = vsyncpa %s8, 0
    %10 = vsyncpa [#allocation4], 0
    %s11 = scalar_lea.sflag [#allocation4], 1
    %12 = vsyncpa %s11, 0
    loop: start=0, step=1, limit=4
    $region2: #{tpu_custom_call.1} parent=1 // loop_pre_header
      _
    $region3: #{tpu_custom_call.1} parent=1 // loop_header
      %s14 = sphi 0, %s18
      %p15 = scmp.ge.s32.totalorder %s14, 4
      %s21 = sphi 0, %s33
      %s22 = sphi 0, %s29
      %s23 = sphi 0, %s21
      %s24 = sphi 0, %s22
      %s25 = sphi 0, %s23
      %s26 = sphi 0, %s24
      %s38 = sphi 0, %s40
      %s41 = sphi 0, %s38
      %s42 = sphi 0, %s41
      %s58 = sphi 0, %s42
      %s62 = sphi 0, %s62
      %s64 = sphi 0, %s62
      %s65 = sphi 0, %s64
      %s79 = sphi 0, %s65
      %s87 = sphi 0, %s89
      %s90 = sphi 0, %s87
      %s91 = sphi 0, %s90
      %s107 = sphi 0, %s91
    $region4: #{tpu_custom_call.1} parent=1 // loop_header_branch
      %17 = sbr.rel (%p15) target = $region8
    $region5: #{tpu_custom_call.1} parent=1 // loop_body
      %s19 = ssub.s32 %s14, 1
      %s20 = ssub.s32 %s14, 2
      %s27 = sadd.s32 1, %s22
      %p28 = scmp.ge.s32.totalorder %s27, 2
      %s29 = scalar_select %p28, 0, %s27
      %s30 = sadd.s32 1, %s21
      %s31 = scalar_select %p28, %s30, %s21
      %p32 = scmp.ge.s32.totalorder %s31, 1
      %s33 = scalar_select %p32, 0, %s31
      %s34 = ssub.s32 %s21, %s33
      %s35 = ssub.s32 %s22, %s29
      %s36 = sor.u32 %s34, %s35
      %p37 = scmp.eq.s32.totalorder %s36, 0
      %s39 = sadd.s32 %s38, 1
      %s40 = scalar_select %p37, %s38, %s39
      %p43 = pneg %p37
      %p44 = scmp.eq.s32.totalorder %s14, 1
      %p45 = por %p43, %p44
      %p46 = scmp.ne.s32.totalorder %s38, %s41
      %p47 = scmp.eq.s32.totalorder %s14, 0
      %p48 = por %p46, %p47
      %p49 = scmp.ne.s32.totalorder %s38, %s41
      %p50 = scmp.eq.s32.totalorder %s19, 1
      %p51 = por %p49, %p50
      %p52 = scmp.ne.s32.totalorder %s41, %s42
      %p53 = scmp.eq.s32.totalorder %s19, 0
      %p54 = por %p52, %p53
      %p55 = scmp.ne.s32.totalorder %s41, %s42
      %p56 = scmp.eq.s32.totalorder %s20, 1
      %p57 = por %p55, %p56
      %p59 = scmp.ne.s32.totalorder %s42, %s58
      %p60 = scmp.eq.s32.totalorder %s20, 0
      %p61 = por %p59, %p60
      %s63 = sadd.s32 %s62, 1
      %p66 = scmp.eq.s32.totalorder %s14, 1
      %p67 = scmp.ne.s32.totalorder %s62, %s64
      %p68 = scmp.eq.s32.totalorder %s14, 0
      %p69 = por %p67, %p68
      %p70 = scmp.ne.s32.totalorder %s62, %s64
      %p71 = scmp.eq.s32.totalorder %s19, 1
      %p72 = por %p70, %p71
      %p73 = scmp.ne.s32.totalorder %s64, %s65
      %p74 = scmp.eq.s32.totalorder %s19, 0
      %p75 = por %p73, %p74
      %p76 = scmp.ne.s32.totalorder %s64, %s65
      %p77 = scmp.eq.s32.totalorder %s20, 1
      %p78 = por %p76, %p77
      %p80 = scmp.ne.s32.totalorder %s65, %s79
      %p81 = scmp.eq.s32.totalorder %s20, 0
      %p82 = por %p80, %p81
      %s83 = ssub.s32 %s21, %s33
      %s84 = ssub.s32 %s22, %s29
      %s85 = sor.u32 %s83, %s84
      %p86 = scmp.eq.s32.totalorder %s85, 0
      %s88 = sadd.s32 %s87, 1
      %s89 = scalar_select %p86, %s87, %s88
      %p92 = pneg %p86
      %p93 = scmp.eq.s32.totalorder %s14, 1
      %p94 = por %p92, %p93
      %p95 = scmp.ne.s32.totalorder %s87, %s90
      %p96 = scmp.eq.s32.totalorder %s14, 0
      %p97 = por %p95, %p96
      %p98 = scmp.ne.s32.totalorder %s87, %s90
      %p99 = scmp.eq.s32.totalorder %s19, 1
      %p100 = por %p98, %p99
      %p101 = scmp.ne.s32.totalorder %s90, %s91
      %p102 = scmp.eq.s32.totalorder %s19, 0
      %p103 = por %p101, %p102
      %p104 = scmp.ne.s32.totalorder %s90, %s91
      %p105 = scmp.eq.s32.totalorder %s20, 1
      %p106 = por %p104, %p105
      %p108 = scmp.ne.s32.totalorder %s91, %s107
      %p109 = scmp.eq.s32.totalorder %s20, 0
      %p110 = por %p108, %p109
      %p111 = scmp.le.s32.totalorder 1, %s14
      %p112 = scmp.lt.s32.totalorder %s14, 3
      %p113 = pnand %p111, %p112
      %p114 = pneg %p113
      // Predicated region
      $region9: #{tpu_custom_call.1} parent=5 // pred_check
        _
      $region10: #{tpu_custom_call.1} parent=5 // pred_check_branch
        %116 = sbr.rel (%p113) target = $region12
      $region11: #{tpu_custom_call.1} parent=5 // pred_region
        %s117 = ssub.s32 %s14, 1
        // Predicated region
        $region13: #{tpu_custom_call.1} parent=11 // pred_check
          %p118 = pneg %p75
        $region14: #{tpu_custom_call.1} parent=11 // pred_check_branch
          %120 = sbr.rel (%p118) target = $region16
        $region15: #{tpu_custom_call.1} parent=11 // pred_region
          _
        $region16: #{tpu_custom_call.1} parent=11 // pred_fallthru
          _
      $region12: #{tpu_custom_call.1} parent=5 // pred_fallthru
        _
      %p121 = scmp.lt.s32.totalorder %s14, 2
      // Predicated region
      $region17: #{tpu_custom_call.1} parent=5 // pred_check
        %p122 = pneg %p121
      $region18: #{tpu_custom_call.1} parent=5 // pred_check_branch
        %124 = sbr.rel (%p122) target = $region20
      $region19: #{tpu_custom_call.1} parent=5 // pred_region
        // Predicated region
        $region21: #{tpu_custom_call.1} parent=19 // pred_check
          %p125 = pneg %p48
        $region22: #{tpu_custom_call.1} parent=19 // pred_check_branch
          %127 = sbr.rel (%p125) target = $region24
        $region23: #{tpu_custom_call.1} parent=19 // pred_region
          %s128 = sand.u32 %s38, 1
          %s129 = scalar_lea.sflag [#allocation3], %s128
          %s130 = sand.u32 %s38, 1
          %s131 = smul.addr %s130, 8
          %s132 = scalar_lea.vmem [#allocation2], %s131
          %s133 = smul.u32 2, %s21
          %135 = vsyncadd %s129, 0
          %s136 = smul.addr %s133, 2
          %s137 = sadd.s32 %s22, %s136
          %s138 = smul.addr %s137, 4
          %s139 = scalar_lea.hbm %s0, %s138
          %s140 = sshll.u32 %s139, 4
          %s141 = int_to_ptr.hbm [resolvable:$true] %s140
          %s142 = sshll.u32 %s132, 4
          %s143 = int_to_ptr.vmem [resolvable:$true] %s142
          %148 = dma.hbm_to_vmem [thread:$0]  %s141, 128, %s143, %s129, 128, 64, 4
        $region24: #{tpu_custom_call.1} parent=19 // pred_fallthru
          _
      $region20: #{tpu_custom_call.1} parent=5 // pred_fallthru
        _
      %p149 = scmp.le.s32.totalorder 1, %s14
      %p150 = scmp.lt.s32.totalorder %s14, 3
      %p151 = pnand %p149, %p150
      %p152 = pneg %p151
      // Predicated region
      $region25: #{tpu_custom_call.1} parent=5 // pred_check
        _
      $region26: #{tpu_custom_call.1} parent=5 // pred_check_branch
        %154 = sbr.rel (%p151) target = $region28
      $region27: #{tpu_custom_call.1} parent=5 // pred_region
        %s155 = ssub.s32 %s14, 1
        %s156 = sand.u32 %s41, 1
        %s157 = scalar_lea.sflag [#allocation3], %s156
        %s158 = sand.u32 %s41, 1
        %s159 = smul.addr %s158, 8
        %s160 = scalar_lea.vmem [#allocation2], %s159
        // Predicated region
        $region29: #{tpu_custom_call.1} parent=27 // pred_check
          %p161 = pneg %p54
        $region30: #{tpu_custom_call.1} parent=27 // pred_check_branch
          %163 = sbr.rel (%p161) target = $region32
        $region31: #{tpu_custom_call.1} parent=27 // pred_region
          %165 = dma.done %s157, 128
        $region32: #{tpu_custom_call.1} parent=27 // pred_fallthru
          _
        %s166 = sand.u32 %s41, 1
        %s167 = scalar_lea.sflag [#allocation3], %s166
        %s168 = sand.u32 %s41, 1
        %s169 = smul.addr %s168, 8
        %s170 = scalar_lea.vmem [#allocation2], %s169
        %p171 = pneg %p54
        %p172 = pneg %p51
        %p173 = pneg %p75
        %p174 = pneg %p72
        %p175 = pneg %p103
        %p176 = pneg %p100
        %s177 = sand.u32 %s90, 1
        %s178 = scalar_lea.sflag [#allocation4], %s177
        %s179 = sand.u32 %s90, 1
        %s180 = smul.addr %s179, 8
        %s181 = scalar_lea.vmem [#allocation5], %s180
        %s182 = smul.u32 2, %s23
        %s183 = smul.u32 2, %s23
        %v184 = vld [vmem:[%s160] sm:$0xf]
        %v185 = vld [vmem:[%s160 + $0x4] sm:$0xf]
        %v186 = vmul.f32 %v184, %v184
        %v187 = vmul.f32 %v185, %v185
        %vm188 = vcmask 1043456
        %v189 = vsel %vm188, %v186, 0.0
        %v190 = vrot.slane %v189, 4
        %v191 = vadd.f32 %v189, %v190
        %v192 = vrot.slane %v191, 2
        %v193 = vadd.f32 %v191, %v192
        %v194 = vrot.slane %v193, 1
        %v195 = vadd.f32 %v193, %v194
        %v196 = vsel %vm188, %v187, 0.0
        %v197 = vrot.slane %v196, 4
        %v198 = vadd.f32 %v196, %v197
        %v199 = vrot.slane %v198, 2
        %v200 = vadd.f32 %v198, %v199
        %v201 = vrot.slane %v200, 1
        %v202 = vadd.f32 %v200, %v201
        %v203 = vmax.f32 %v195, 1e-24
        %v204 = vmax.f32 %v202, 1e-24
        %v205 = vrsqrt.pop %v203
        %v206 = vmul.f32 %v205, %v203
        %v207 = vmul.f32 %v206, %v205
        %v208 = vmul.f32 0.5, %v207
        %v209 = vsub.f32 1.5, %v208
        %v210 = vmul.f32 %v205, %v209
        %vm211 = vweird.f32 %v203
        %vm212 = vweird.f32 %v205
        %vm213 = vmor %vm211, %vm212
        %v214 = vsel %vm213, %v205, %v210
        %v215 = vrsqrt.pop %v204
        %v216 = vmul.f32 %v215, %v204
        %v217 = vmul.f32 %v216, %v215
        %v218 = vmul.f32 0.5, %v217
        %v219 = vsub.f32 1.5, %v218
        %v220 = vmul.f32 %v215, %v219
        %vm221 = vweird.f32 %v204
        %vm222 = vweird.f32 %v215
        %vm223 = vmor %vm221, %vm222
        %v224 = vsel %vm223, %v215, %v220
        %v225 = vmul.f32 %v184, %v214
        %v226 = vmul.f32 %v185, %v224
        %v227 = vld [vmem:[%s1] sm:$0xf]
        %229 = vset.pattern.permute.xlu0 0
        %230 = vperm.xlu0 %229, %v227
        %v231 = vpop.permute.xlu0 %230
        %v233 = vmul.f32 %v225, %v231
        %v234 = vmul.f32 %v226, %v231
        %235 = vst [vmem:[%s181] sm:$0xf] %v233
        %236 = vst [vmem:[%s181 + $0x4] sm:$0xf] %v234
        %s237 = sand.u32 %s90, 1
        %s238 = scalar_lea.sflag [#allocation4], %s237
        %s239 = sand.u32 %s90, 1
        %s240 = smul.addr %s239, 8
        %s241 = scalar_lea.vmem [#allocation5], %s240
        // Predicated region
        $region33: #{tpu_custom_call.1} parent=27 // pred_check
          %p242 = pneg %p100
        $region34: #{tpu_custom_call.1} parent=27 // pred_check_branch
          %244 = sbr.rel (%p242) target = $region36
        $region35: #{tpu_custom_call.1} parent=27 // pred_region
          %s245 = smul.u32 2, %s23
          %247 = vsyncadd %s238, 0
          %s248 = smul.addr %s245, 2
          %s249 = sadd.s32 %s24, %s248
          %s250 = smul.addr %s249, 4
          %s251 = scalar_lea.hbm %s2, %s250
          %s252 = sshll.u32 %s241, 4
          %s253 = int_to_ptr.vmem [resolvable:$true] %s252
          %s254 = sshll.u32 %s251, 4
          %s255 = int_to_ptr.hbm [resolvable:$true] %s254
          %260 = dma.vmem_to_hbm [thread:$0]  %s253, 128, %s255, %s238, 64, 128, 4
        $region36: #{tpu_custom_call.1} parent=27 // pred_fallthru
          _
      $region28: #{tpu_custom_call.1} parent=5 // pred_fallthru
        _
      %p261 = scmp.le.s32.totalorder 2, %s14
      // Predicated region
      $region37: #{tpu_custom_call.1} parent=5 // pred_check
        %p262 = pneg %p261
      $region38: #{tpu_custom_call.1} parent=5 // pred_check_branch
        %264 = sbr.rel (%p262) target = $region40
      $region39: #{tpu_custom_call.1} parent=5 // pred_region
        %s265 = ssub.s32 %s14, 2
        // Predicated region
        $region41: #{tpu_custom_call.1} parent=39 // pred_check
          %p266 = pneg %p106
        $region42: #{tpu_custom_call.1} parent=39 // pred_check_branch
          %268 = sbr.rel (%p266) target = $region44
        $region43: #{tpu_custom_call.1} parent=39 // pred_region
          %s269 = sand.u32 %s91, 1
          %s270 = scalar_lea.sflag [#allocation4], %s269
          %s271 = sand.u32 %s91, 1
          %s272 = smul.addr %s271, 8
          %s273 = scalar_lea.vmem [#allocation5], %s272
          %275 = dma.done %s270, 128
        $region44: #{tpu_custom_call.1} parent=39 // pred_fallthru
          _
      $region40: #{tpu_custom_call.1} parent=5 // pred_fallthru
        _
    $region6: #{tpu_custom_call.1} parent=1 // loop_footer
      %s18 = sadd.s32 1, %s14
    $region7: #{tpu_custom_call.1} parent=1 // loop_footer_branch
      %13 = sbr.rel target = $region3
    $region8: #{tpu_custom_call.1} parent=1 // loop_exit
      _
    %276 = vsyncpa [#allocation3], 1
    %s277 = scalar_lea.sflag [#allocation3], 1
    %278 = vsyncpa %s277, 1
    %279 = vsyncpa [#allocation4], 1
    %s280 = scalar_lea.sflag [#allocation4], 1
    %281 = vsyncpa %s280, 1

</llo_original>
